<compile_context>
chip_gen: v7x
topology: tpu7x:2x2x1
jax: 0.10.0
libtpu: 0.0.40
codegen_flags: <defaults>
</compile_context>

<pallas_src>
import jax
import jax.numpy as jnp
from jax.experimental import pallas as pl
from jax.experimental.pallas import tpu as pltpu

STATE_DIM = 4
HIDDEN = 64


def _round_up(x, m):
    return ((x + m - 1) // m) * m


def _default_pack():
    """2-row packing (128-wide) for v5e and older; 4-row (256-wide) for v6e/v7x."""
    try:
        kind = jax.devices()[0].device_kind.lower()
        if any(tag in kind for tag in ("v6", "v7", "7x")):
            return 4
        return 2
    except Exception:
        return 2


def critic_kernel(x_ref, w1p_ref, b1p_ref, w2p_ref, b2p_ref, w3p_ref, b3p_ref,
                  o_ref):
    """One batch tile of the fused, lane-packed MLP.

    x_ref  : (RB, 4P)   VMEM  packed state tile (P batch rows per vreg row)
    w1p_ref: (4P, 64P)  VMEM  block-diag W1, f32, resident
    b1p_ref: (1, 64P)   VMEM  tiled b1, f32, resident
    w2p_ref: (64P, 64P) VMEM  block-diag W2, bf16, resident
    b2p_ref: (1, 64P)   VMEM  tiled b2, f32, resident
    w3p_ref: (64P, P)   VMEM  block-diag value head, f32, resident
    b3p_ref: (1, P)     VMEM  broadcast b3, f32, resident
    o_ref  : (RB, P)    VMEM  P values per packed row
    """
    x = x_ref[...]                                           # (RB, 4P) f32

    # Layer 1 on the MXU in f32 (K = 4P is tiny; keeps state precision and
    # removes the per-feature lane broadcasts from the XLU).
    h1 = jnp.dot(x, w1p_ref[...], preferred_element_type=jnp.float32)
    h1 = jnp.maximum(h1 + b1p_ref[...], 0.0)                 # (RB, 64P) f32

    # Layer 2 on the MXU: bf16 operands, f32 accumulation -> single MXU pass.
    h2 = jnp.dot(h1.astype(jnp.bfloat16), w2p_ref[...],
                 preferred_element_type=jnp.float32)
    h2 = jnp.maximum(h2 + b2p_ref[...], 0.0)                 # (RB, 64P) f32

    # Value head as a tiny f32 MXU matmul (K=64P, N=P) -> no XLU reduction,
    # no lane relayout; output block is lane-masked but only ~RB*P*4 bytes.
    v = jnp.dot(h2, w3p_ref[...], preferred_element_type=jnp.float32)
    o_ref[...] = (v + b3p_ref[...]).astype(o_ref.dtype)      # (RB, P)


def critic_forward(state, params, pack=None, block_rows=None):
    """Pallas forward of the Critic MLP. state: (B, 4) f32 -> (B, 1) f32."""
    B, F = state.shape
    assert F == STATE_DIM

    P = _default_pack() if pack is None else pack
    FP = STATE_DIM * P                      # packed feature width (8 or 16)
    HP = HIDDEN * P                         # packed hidden width (128 or 256)

    w1, b1 = params["w1"], params["b1"]
    w2, b2 = params["w2"], params["b2"]
    w3, b3 = params["w3"], params["b3"]

    # Block-diagonal / tiled parameters (built once per call, tiny).
    eye = jnp.eye(P, dtype=jnp.float32)
    w1p = jnp.kron(eye, w1)                                   # (FP, HP)  f32
    b1p = jnp.tile(b1.reshape(1, HIDDEN), (1, P))             # (1, HP)   f32
    w2p = jnp.kron(eye, w2).astype(jnp.bfloat16)              # (HP, HP)  bf16
    b2p = jnp.tile(b2.reshape(1, HIDDEN), (1, P))             # (1, HP)   f32
    w3p = jnp.kron(eye, w3.reshape(HIDDEN, 1))                # (HP, P)   f32
    b3p = jnp.broadcast_to(b3.reshape(1, 1), (1, P)).astype(jnp.float32)

    # Tile sizing in *packed* rows: 128 (P=2) / 64 (P=4) keeps h1/h2 live
    # ranges inside the 64-vreg file (no spill); round tile count to even so
    # the "parallel" batch axis balances across both v7x TensorCores.
    r_rows = pl.cdiv(B, P)                                    # packed rows of data
    if block_rows is None:
        target = 128 if P <= 2 else 64
        rb = min(target, _round_up(r_rows, 8))
    else:
        rb = block_rows
    num_tiles = pl.cdiv(r_rows, rb)
    if num_tiles > 1 and num_tiles % 2 == 1:
        num_tiles += 1
        rb = _round_up(pl.cdiv(r_rows, num_tiles), 8)

    rows_pad = num_tiles * rb                                 # packed rows incl. pad
    pad = rows_pad * P - B
    # Explicit zero padding: padded rows produce finite values (no stale VMEM).
    x_packed = jnp.pad(state, ((0, pad), (0, 0))).reshape(rows_pad, FP)

    flops = 2 * B * (STATE_DIM * HIDDEN + HIDDEN * HIDDEN + HIDDEN)
    bytes_accessed = (B * STATE_DIM + B) * 4 + w1p.size * 4 + w2p.size * 2 \
        + (b1p.size + b2p.size + w3p.size + b3p.size) * 4

    grid_spec = pltpu.PrefetchScalarGridSpec(
        num_scalar_prefetch=0,
        grid=(num_tiles,),
        in_specs=[
            pl.BlockSpec((rb, FP), lambda i: (i, 0)),         # packed state tile
            pl.BlockSpec((FP, HP), lambda i: (0, 0)),         # w1p (resident)
            pl.BlockSpec((1, HP), lambda i: (0, 0)),          # b1p (resident)
            pl.BlockSpec((HP, HP), lambda i: (0, 0)),         # w2p bf16 (resident)
            pl.BlockSpec((1, HP), lambda i: (0, 0)),          # b2p (resident)
            pl.BlockSpec((HP, P), lambda i: (0, 0)),          # w3p (resident)
            pl.BlockSpec((1, P), lambda i: (0, 0)),           # b3p (resident)
        ],
        out_specs=pl.BlockSpec((rb, P), lambda i: (i, 0)),
    )

    out = pl.pallas_call(
        critic_kernel,
        out_shape=jax.ShapeDtypeStruct((rows_pad, P), jnp.float32),
        grid_spec=grid_spec,
        compiler_params=pltpu.CompilerParams(
            dimension_semantics=("parallel",)),               # megacore on v7x
        cost_estimate=pl.CostEstimate(flops=flops, transcendentals=0,
                                      bytes_accessed=bytes_accessed),
    )(x_packed, w1p, b1p, w2p, b2p, w3p, b3p)

    # Row-major flatten restores original batch order: out[r, j] is row r*P + j.
    return out.reshape(-1)[:B].reshape(B, 1)


def critic_ref(state, p):
    """High-precision plain-JAX reference (true-f32 matmuls)."""
    hi = jax.lax.Precision.HIGHEST
    h1 = jnp.maximum(jnp.dot(state, p["w1"], precision=hi) + p["b1"], 0.0)
    h2 = jnp.maximum(jnp.dot(h1, p["w2"], precision=hi) + p["b2"], 0.0)
    return jnp.dot(h2, p["w3"], precision=hi) + p["b3"]


def critic_value(state, params, pallas_min_batch=256):
    """Dispatcher: tiny batches are pure launch overhead -> plain XLA."""
    if state.shape[0] < pallas_min_batch:
        return critic_ref(state, params)
    return critic_forward(state, params)


def init_params(key):
    """Deterministic init matching the PyTorch module's shapes.
    Weights stored as (in_features, out_features) so the kernel does x @ W."""
    k1, k2, k3, k4, k5, k6 = jax.random.split(key, 6)

    def lin(kw, kb, fan_in, fan_out):
        bound = 1.0 / jnp.sqrt(fan_in)
        w = jax.random.uniform(kw, (fan_in, fan_out), jnp.float32, -bound, bound)
        b = jax.random.uniform(kb, (1, fan_out), jnp.float32, -bound, bound)
        return w, b

    w1, b1 = lin(k1, k2, STATE_DIM, HIDDEN)
    w2, b2 = lin(k3, k4, HIDDEN, HIDDEN)
    w3, b3 = lin(k5, k6, HIDDEN, 1)
    return {"w1": w1, "b1": b1, "w2": w2, "b2": b2, "w3": w3, "b3": b3}


if __name__ == "__main__":
    key = jax.random.PRNGKey(0)
    k_params, k_s1, k_s2 = jax.random.split(key, 3)
    params = init_params(k_params)

    # bf16 MXU operands change results at ~1e-3; compare loosely vs true-f32 ref.
    ATOL = RTOL = 2e-2

    # Small batch, 2-row packing (single tiny tile; exercises zero-pad path).
    state_small = jax.random.normal(k_s1, (8, STATE_DIM), dtype=jnp.float32)
    out_small = jax.block_until_ready(critic_forward(state_small, params, pack=2))
    ref_small = critic_ref(state_small, params)
    assert out_small.shape == (8, 1), out_small.shape
    assert jnp.allclose(out_small, ref_small, atol=ATOL, rtol=RTOL), \
        "mismatch vs JAX reference (small batch, pack=2)"

    # Larger batch, 4-row packing (256-wide path for v6e/v7x), multi-tile grid.
    state_big = jax.random.normal(k_s2, (512, STATE_DIM), dtype=jnp.float32)
    out_big4 = jax.block_until_ready(critic_forward(state_big, params, pack=4))
    ref_big = critic_ref(state_big, params)
    assert out_big4.shape == (512, 1), out_big4.shape
    assert jnp.allclose(out_big4, ref_big, atol=ATOL, rtol=RTOL), \
        "mismatch vs JAX reference (pack=4)"

    # Device-default packing + 2-row packing on the multi-tile batch.
    out_big2 = jax.block_until_ready(critic_forward(state_big, params, pack=2))
    assert jnp.allclose(out_big2, ref_big, atol=ATOL, rtol=RTOL), \
        "mismatch vs JAX reference (pack=2)"
    out_def = jax.block_until_ready(critic_forward(state_big, params))
    assert jnp.allclose(out_def, ref_big, atol=ATOL, rtol=RTOL), \
        "mismatch vs JAX reference (default pack)"

    # Dispatcher sanity check (routes tiny batches to plain XLA).
    out_disp = jax.block_until_ready(critic_value(state_small, params))
    assert jnp.allclose(out_disp, ref_small, atol=1e-5, rtol=1e-5)

    print("KERNEL_OK")
</pallas_src>

<mosaic_0001>
module attributes {stable_mosaic.version = 11 : i64} {
  func.func @critic_kernel(%arg0: i32, %arg1: memref<8x8xf32, #tpu.memory_space<vmem>>, %arg2: memref<8x128xf32, #tpu.memory_space<vmem>>, %arg3: memref<1x128xf32, #tpu.memory_space<vmem>>, %arg4: memref<128x128xbf16, #tpu.memory_space<vmem>>, %arg5: memref<1x128xf32, #tpu.memory_space<vmem>>, %arg6: memref<128x2xf32, #tpu.memory_space<vmem>>, %arg7: memref<1x2xf32, #tpu.memory_space<vmem>>, %arg8: memref<8x2xf32, #tpu.memory_space<vmem>>) attributes {dimension_semantics = [#tpu.dimension_semantics<parallel>], iteration_bounds = array<i64: 1>, scalar_prefetch = 0 : i64, scratch_operands = 0 : i64, tpu.core_type = #tpu.core_type<tc>, window_params = [{transform_indices = @transform_0, window_bounds = array<i64: 8, 8>}, {pipeline_mode = #tpu.pipeline_mode<synchronous>, transform_indices = @transform_1, window_bounds = array<i64: 8, 128>}, {pipeline_mode = #tpu.pipeline_mode<synchronous>, transform_indices = @transform_2, window_bounds = array<i64: 1, 128>}, {pipeline_mode = #tpu.pipeline_mode<synchronous>, transform_indices = @transform_3, window_bounds = array<i64: 128, 128>}, {pipeline_mode = #tpu.pipeline_mode<synchronous>, transform_indices = @transform_4, window_bounds = array<i64: 1, 128>}, {pipeline_mode = #tpu.pipeline_mode<synchronous>, transform_indices = @transform_5, window_bounds = array<i64: 128, 2>}, {pipeline_mode = #tpu.pipeline_mode<synchronous>, transform_indices = @transform_6, window_bounds = array<i64: 1, 2>}, {transform_indices = @transform_7, window_bounds = array<i64: 8, 2>}]} {
    %c0 = arith.constant 0 : index
    %c0_0 = arith.constant 0 : index
    %0 = vector.load %arg1[%c0, %c0_0] : memref<8x8xf32, #tpu.memory_space<vmem>>, vector<8x8xf32>
    %c0_1 = arith.constant 0 : index
    %c0_2 = arith.constant 0 : index
    %1 = vector.load %arg2[%c0_1, %c0_2] : memref<8x128xf32, #tpu.memory_space<vmem>>, vector<8x128xf32>
    %cst = arith.constant dense<0.000000e+00> : vector<8x128xf32>
    %2 = tpu.matmul %0, %1, %cst {dimension_numbers = #tpu.dot_dimension_numbers<[1], [0], [0], [1], [0, 0, 1, 1], [], []>} : vector<8x8xf32>, vector<8x128xf32>, vector<8x128xf32> -> vector<8x128xf32>
    %c0_3 = arith.constant 0 : index
    %c0_4 = arith.constant 0 : index
    %3 = vector.load %arg3[%c0_3, %c0_4] : memref<1x128xf32, #tpu.memory_space<vmem>>, vector<1x128xf32>
    %4 = vector.broadcast %3 : vector<1x128xf32> to vector<8x128xf32>
    %5 = arith.addf %2, %4 : vector<8x128xf32>
    %cst_5 = arith.constant 0.000000e+00 : f32
    %6 = vector.broadcast %cst_5 : f32 to vector<8x128xf32>
    %7 = arith.maximumf %5, %6 : vector<8x128xf32>
    %8 = arith.truncf %7 : vector<8x128xf32> to vector<8x128xbf16>
    %c0_6 = arith.constant 0 : index
    %c0_7 = arith.constant 0 : index
    %9 = vector.load %arg4[%c0_6, %c0_7] : memref<128x128xbf16, #tpu.memory_space<vmem>>, vector<128x128xbf16>
    %cst_8 = arith.constant dense<0.000000e+00> : vector<8x128xf32>
    %10 = tpu.matmul %8, %9, %cst_8 {dimension_numbers = #tpu.dot_dimension_numbers<[1], [0], [0], [1], [0, 0, 1, 1], [], []>} : vector<8x128xbf16>, vector<128x128xbf16>, vector<8x128xf32> -> vector<8x128xf32>
    %c0_9 = arith.constant 0 : index
    %c0_10 = arith.constant 0 : index
    %11 = vector.load %arg5[%c0_9, %c0_10] : memref<1x128xf32, #tpu.memory_space<vmem>>, vector<1x128xf32>
    %12 = vector.broadcast %11 : vector<1x128xf32> to vector<8x128xf32>
    %13 = arith.addf %10, %12 : vector<8x128xf32>
    %cst_11 = arith.constant 0.000000e+00 : f32
    %14 = vector.broadcast %cst_11 : f32 to vector<8x128xf32>
    %15 = arith.maximumf %13, %14 : vector<8x128xf32>
    %c0_12 = arith.constant 0 : index
    %c0_13 = arith.constant 0 : index
    %16 = vector.load %arg6[%c0_12, %c0_13] : memref<128x2xf32, #tpu.memory_space<vmem>>, vector<128x2xf32>
    %cst_14 = arith.constant dense<0.000000e+00> : vector<8x2xf32>
    %17 = tpu.matmul %15, %16, %cst_14 {dimension_numbers = #tpu.dot_dimension_numbers<[1], [0], [0], [1], [0, 0, 1, 1], [], []>} : vector<8x128xf32>, vector<128x2xf32>, vector<8x2xf32> -> vector<8x2xf32>
    %c0_15 = arith.constant 0 : index
    %c0_16 = arith.constant 0 : index
    %18 = vector.load %arg7[%c0_15, %c0_16] : memref<1x2xf32, #tpu.memory_space<vmem>>, vector<1x2xf32>
    %19 = vector.broadcast %18 : vector<1x2xf32> to vector<8x2xf32>
    %20 = arith.addf %17, %19 : vector<8x2xf32>
    %c0_17 = arith.constant 0 : index
    %c0_18 = arith.constant 0 : index
    %21 = vector.load %arg8[%c0_17, %c0_18] : memref<8x2xf32, #tpu.memory_space<vmem>>, vector<8x2xf32>
    tpu.vector_store %arg8[%c0_17, %c0_18], %20 {strides = array<i32>} : memref<8x2xf32, #tpu.memory_space<vmem>>, vector<8x2xf32>,
    return
  }
  func.func @transform_0(%arg0: i32) -> (i32, i32) {
    %c0_i32 = arith.constant 0 : i32
    %c0_i32_0 = arith.constant 0 : i32
    return %arg0, %c0_i32 : i32, i32
  }
  func.func @transform_1(%arg0: i32) -> (i32, i32) {
    %c0_i32 = arith.constant 0 : i32
    %c0_i32_0 = arith.constant 0 : i32
    %c0_i32_1 = arith.constant 0 : i32
    return %c0_i32, %c0_i32_0 : i32, i32
  }
  func.func @transform_2(%arg0: i32) -> (i32, i32) {
    %c0_i32 = arith.constant 0 : i32
    %c0_i32_0 = arith.constant 0 : i32
    %c0_i32_1 = arith.constant 0 : i32
    return %c0_i32, %c0_i32_0 : i32, i32
  }
  func.func @transform_3(%arg0: i32) -> (i32, i32) {
    %c0_i32 = arith.constant 0 : i32
    %c0_i32_0 = arith.constant 0 : i32
    %c0_i32_1 = arith.constant 0 : i32
    return %c0_i32, %c0_i32_0 : i32, i32
  }
  func.func @transform_4(%arg0: i32) -> (i32, i32) {
    %c0_i32 = arith.constant 0 : i32
    %c0_i32_0 = arith.constant 0 : i32
    %c0_i32_1 = arith.constant 0 : i32
    return %c0_i32, %c0_i32_0 : i32, i32
  }
  func.func @transform_5(%arg0: i32) -> (i32, i32) {
    %c0_i32 = arith.constant 0 : i32
    %c0_i32_0 = arith.constant 0 : i32
    %c0_i32_1 = arith.constant 0 : i32
    return %c0_i32, %c0_i32_0 : i32, i32
  }
  func.func @transform_6(%arg0: i32) -> (i32, i32) {
    %c0_i32 = arith.constant 0 : i32
    %c0_i32_0 = arith.constant 0 : i32
    %c0_i32_1 = arith.constant 0 : i32
    return %c0_i32, %c0_i32_0 : i32, i32
  }
  func.func @transform_7(%arg0: i32) -> (i32, i32) {
    %c0_i32 = arith.constant 0 : i32
    %c0_i32_0 = arith.constant 0 : i32
    return %arg0, %c0_i32 : i32, i32
  }
}

</mosaic_0001>

<llo_original>
// kernel: tpu_custom_call.1
$region0: #{tpu_custom_call.1}
  #allocation0 [shape = 'u32[]', space=smem, size = 0x4, offset = 0x4, fixed_abs, tag = 'smem constant byte address 0x4 - core index']
  #allocation1 [shape = 'u32[144,128]{1,0:T(1,128)}', space=vmem, size = 0x12000, scoped, tag = 'internal scratch']
  %s0 = inlined_call_operand.vmem [shape: f32[8,8], index: 0, kind: input, shape index: {}]
  %s1 = inlined_call_operand.vmem [shape: f32[8,128], index: 1, kind: input, shape index: {}]
  %s2 = inlined_call_operand.vmem [shape: f32[1,128], index: 2, kind: input, shape index: {}]
  %s3 = inlined_call_operand.vmem [shape: bf16[128,128], index: 3, kind: input, shape index: {}]
  %s4 = inlined_call_operand.vmem [shape: f32[1,128], index: 4, kind: input, shape index: {}]
  %s5 = inlined_call_operand.vmem [shape: f32[128,2], index: 5, kind: input, shape index: {}]
  %s6 = inlined_call_operand.vmem [shape: f32[1,2], index: 6, kind: input, shape index: {}]
  %s7 = inlined_call_operand.vmem [shape: f32[8,2], index: 7, kind: output, shape index: {}]
  %s8 = sld [smem:[#allocation0]]
  $region38: #{tpu_custom_call.1} parent=0
    _
  %s10 = ssub.s32 1, %s8
  %s11 = scalar_select 0, %s10, %s8
  // Predicated region
  $region2: #{tpu_custom_call.1} parent=0 // pred_check
    _
  $region3: #{tpu_custom_call.1} parent=0 // pred_check_branch
    %13 = sbr.rel (0) target = $region5
  $region4: #{tpu_custom_call.1} parent=0 // pred_region
    _
  $region5: #{tpu_custom_call.1} parent=0 // pred_fallthru
    _
  // Predicated region
  $region6: #{tpu_custom_call.1} parent=0 // pred_check
    _
  $region7: #{tpu_custom_call.1} parent=0 // pred_check_branch
    %15 = sbr.rel (0) target = $region9
  $region8: #{tpu_custom_call.1} parent=0 // pred_region
    _
  $region9: #{tpu_custom_call.1} parent=0 // pred_fallthru
    _
  // Predicated region
  $region10: #{tpu_custom_call.1} parent=0 // pred_check
    _
  $region11: #{tpu_custom_call.1} parent=0 // pred_check_branch
    %17 = sbr.rel (0) target = $region13
  $region12: #{tpu_custom_call.1} parent=0 // pred_region
    _
  $region13: #{tpu_custom_call.1} parent=0 // pred_fallthru
    _
  // Predicated region
  $region14: #{tpu_custom_call.1} parent=0 // pred_check
    _
  $region15: #{tpu_custom_call.1} parent=0 // pred_check_branch
    %19 = sbr.rel (0) target = $region17
  $region16: #{tpu_custom_call.1} parent=0 // pred_region
    _
  $region17: #{tpu_custom_call.1} parent=0 // pred_fallthru
    _
  // Predicated region
  $region18: #{tpu_custom_call.1} parent=0 // pred_check
    _
  $region19: #{tpu_custom_call.1} parent=0 // pred_check_branch
    %21 = sbr.rel (0) target = $region21
  $region20: #{tpu_custom_call.1} parent=0 // pred_region
    _
  $region21: #{tpu_custom_call.1} parent=0 // pred_fallthru
    _
  // Predicated region
  $region22: #{tpu_custom_call.1} parent=0 // pred_check
    _
  $region23: #{tpu_custom_call.1} parent=0 // pred_check_branch
    %23 = sbr.rel (0) target = $region25
  $region24: #{tpu_custom_call.1} parent=0 // pred_region
    _
  $region25: #{tpu_custom_call.1} parent=0 // pred_fallthru
    _
  // Predicated region
  $region26: #{tpu_custom_call.1} parent=0 // pred_check
    _
  $region27: #{tpu_custom_call.1} parent=0 // pred_check_branch
    %25 = sbr.rel (0) target = $region29
  $region28: #{tpu_custom_call.1} parent=0 // pred_region
    _
  $region29: #{tpu_custom_call.1} parent=0 // pred_fallthru
    _
  %v27 = vld [vmem:[%s0] sm:$0xff]
  %v28 = vld [vmem:[%s1] sm:$0xff]
  %v29 = vld [vmem:[%s2] sm:$0x1]
  %v31 = vlaneseq
  %v32 = vshrl.u32 %v31, 7
  %v33 = vsub.s32 0, %v32
  %v34 = vrot.slane %v29, %v33
  %vm36 = vcmask 64512
  %v38 = vsel %vm36, %v27, 0
  %40 = vmatprep.subr.mxu0 0.0
  %41 = vmatpush1.msra.mxu0 %v28
  %42 = vmatprep.subr.mxu0 0.0
  %43 = vmatpush1.msra.mxu0 0.0
  %44 = vmatprep.subr.mxu0 0.0
  %45 = vmatpush1.msra.mxu0 0.0
  %46 = vmatprep.subr.mxu0 0.0
  %47 = vmatpush1.msra.mxu0 0.0
  %48 = vmatprep.subr.mxu0 0.0
  %49 = vmatpush1.msra.mxu0 0.0
  %50 = vmatprep.subr.mxu0 0.0
  %51 = vmatpush1.msra.mxu0 0.0
  %52 = vmatprep.subr.mxu0 0.0
  %53 = vmatpush1.msra.mxu0 0.0
  %54 = vmatprep.subr.mxu0 0.0
  %55 = vmatpush1.msra.mxu0 0.0
  %56 = vmatprep.subr.mxu0 0.0
  %57 = vmatpush1.msra.mxu0 0.0
  %58 = vmatprep.subr.mxu0 0.0
  %59 = vmatpush1.msra.mxu0 0.0
  %60 = vmatprep.subr.mxu0 0.0
  %61 = vmatpush1.msra.mxu0 0.0
  %62 = vmatprep.subr.mxu0 0.0
  %63 = vmatpush1.msra.mxu0 0.0
  %64 = vmatprep.subr.mxu0 0.0
  %65 = vmatpush1.msra.mxu0 0.0
  %66 = vmatprep.subr.mxu0 0.0
  %67 = vmatpush1.msra.mxu0 0.0
  %68 = vmatprep.subr.mxu0 0.0
  %69 = vmatpush1.msra.mxu0 0.0
  %70 = vmatprep.subr.mxu0 0.0
  %71 = vmatpush1.msra.mxu0 0.0
  %72 = vmatprep.subr.mxu0 0.0
  %73 = vmatpush1.msra.mxu0 0.0
  %74 = vmatprep.subr.mxu0 0.0
  %75 = vmatpush1.msra.mxu0 0.0
  %76 = vmatprep.subr.mxu0 0.0
  %77 = vmatpush1.msra.mxu0 0.0
  %78 = vmatprep.subr.mxu0 0.0
  %79 = vmatpush1.msra.mxu0 0.0
  %80 = vmatprep.subr.mxu0 0.0
  %81 = vmatpush1.msra.mxu0 0.0
  %82 = vmatprep.subr.mxu0 0.0
  %83 = vmatpush1.msra.mxu0 0.0
  %84 = vmatprep.subr.mxu0 0.0
  %85 = vmatpush1.msra.mxu0 0.0
  %86 = vmatprep.subr.mxu0 0.0
  %87 = vmatpush1.msra.mxu0 0.0
  %88 = vmatprep.subr.mxu0 0.0
  %89 = vmatpush1.msra.mxu0 0.0
  %90 = vmatprep.subr.mxu0 0.0
  %91 = vmatpush1.msra.mxu0 0.0
  %92 = vmatprep.subr.mxu0 0.0
  %93 = vmatpush1.msra.mxu0 0.0
  %94 = vmatprep.subr.mxu0 0.0
  %95 = vmatpush1.msra.mxu0 0.0
  %96 = vmatprep.subr.mxu0 0.0
  %97 = vmatpush1.msra.mxu0 0.0
  %98 = vmatprep.subr.mxu0 0.0
  %99 = vmatpush1.msra.mxu0 0.0
  %100 = vmatprep.subr.mxu0 0.0
  %101 = vmatpush1.msra.mxu0 0.0
  %102 = vmatprep.subr.mxu0 0.0
  %103 = vmatpush1.msra.mxu0 0.0
  %104 = vmatprep.mubr.f32.mxu0 0.0
  %105 = vmatmul.mubr.f32.gmra.mrb[0].mxu0 %v38
  %v106 = vpop.f32.mrb[0].mxu0
  %v107 = vadd.f32 %v34, %v106
  %v108 = vpop.f32.mrb[0].mxu0
  %109 = vdwg.mxu0
  %v110 = vmax.f32 %v107, 0.0
  %v111 = vpack.c.bf16 %v110, %v110
  %v112 = vld [vmem:[%s3] sm:$0xf]
  %v113 = vld [vmem:[%s3 + $0x4] sm:$0xf]
  %v114 = vld [vmem:[%s3 + $0x8] sm:$0xf]
  %v115 = vld [vmem:[%s3 + $0xc] sm:$0xf]
  %v116 = vld [vmem:[%s3 + $0x10] sm:$0xf]
  %v117 = vld [vmem:[%s3 + $0x14] sm:$0xf]
  %v118 = vld [vmem:[%s3 + $0x18] sm:$0xf]
  %v119 = vld [vmem:[%s3 + $0x1c] sm:$0xf]
  %v120 = vld [vmem:[%s3 + $0x20] sm:$0xf]
  %v121 = vld [vmem:[%s3 + $0x24] sm:$0xf]
  %v122 = vld [vmem:[%s3 + $0x28] sm:$0xf]
  %v123 = vld [vmem:[%s3 + $0x2c] sm:$0xf]
  %v124 = vld [vmem:[%s3 + $0x30] sm:$0xf]
  %v125 = vld [vmem:[%s3 + $0x34] sm:$0xf]
  %v126 = vld [vmem:[%s3 + $0x38] sm:$0xf]
  %v127 = vld [vmem:[%s3 + $0x3c] sm:$0xf]
  %v128 = vld [vmem:[%s4] sm:$0x1]
  %v130 = vlaneseq
  %v131 = vshrl.u32 %v130, 7
  %v132 = vsub.s32 0, %v131
  %v133 = vrot.slane %v128, %v132
  %v151 = vunpack.c.l.b16 %v112
  %v152 = vunpack.c.l.b16 %v113
  %v153 = vunpack.c.l.b16 %v114
  %v154 = vunpack.c.l.b16 %v115
  %v155 = vunpack.c.l.b16 %v116
  %v156 = vunpack.c.l.b16 %v117
  %v157 = vunpack.c.l.b16 %v118
  %v158 = vunpack.c.l.b16 %v119
  %v159 = vunpack.c.l.b16 %v120
  %v160 = vunpack.c.l.b16 %v121
  %v161 = vunpack.c.l.b16 %v122
  %v162 = vunpack.c.l.b16 %v123
  %v163 = vunpack.c.l.b16 %v124
  %v164 = vunpack.c.l.b16 %v125
  %v165 = vunpack.c.l.b16 %v126
  %v166 = vunpack.c.l.b16 %v127
  %v167 = vpack.c.b16 %v152, %v151
  %v168 = vpack.c.b16 %v154, %v153
  %v169 = vpack.c.b16 %v156, %v155
  %v170 = vpack.c.b16 %v158, %v157
  %v171 = vpack.c.b16 %v160, %v159
  %v172 = vpack.c.b16 %v162, %v161
  %v173 = vpack.c.b16 %v164, %v163
  %v174 = vpack.c.b16 %v166, %v165
  %183 = vmatprep.subr.bf16.mxu0 0
  %184 = vmatpush1.bf16.msra.mxu0 %v167
  %185 = vmatprep.subr.bf16.mxu0 0
  %186 = vmatpush1.bf16.msra.mxu0 %v168
  %187 = vmatprep.subr.bf16.mxu0 0
  %188 = vmatpush1.bf16.msra.mxu0 %v169
  %189 = vmatprep.subr.bf16.mxu0 0
  %190 = vmatpush1.bf16.msra.mxu0 %v170
  %191 = vmatprep.subr.bf16.mxu0 0
  %192 = vmatpush1.bf16.msra.mxu0 %v171
  %193 = vmatprep.subr.bf16.mxu0 0
  %194 = vmatpush1.bf16.msra.mxu0 %v172
  %195 = vmatprep.subr.bf16.mxu0 0
  %196 = vmatpush1.bf16.msra.mxu0 %v173
  %197 = vmatprep.subr.bf16.mxu0 0
  %198 = vmatpush1.bf16.msra.mxu0 %v174
  %199 = vmatprep.subr.bf16.mxu0 0
  %200 = vmatpush1.bf16.msra.mxu0 0
  %201 = vmatprep.subr.bf16.mxu0 0
  %202 = vmatpush1.bf16.msra.mxu0 0
  %203 = vmatprep.subr.bf16.mxu0 0
  %204 = vmatpush1.bf16.msra.mxu0 0
  %205 = vmatprep.subr.bf16.mxu0 0
  %206 = vmatpush1.bf16.msra.mxu0 0
  %207 = vmatprep.subr.bf16.mxu0 0
  %208 = vmatpush1.bf16.msra.mxu0 0
  %209 = vmatprep.subr.bf16.mxu0 0
  %210 = vmatpush1.bf16.msra.mxu0 0
  %211 = vmatprep.subr.bf16.mxu0 0
  %212 = vmatpush1.bf16.msra.mxu0 0
  %213 = vmatprep.subr.bf16.mxu0 0
  %214 = vmatpush1.bf16.msra.mxu0 0
  %215 = vmatprep.mubr.bf16.mxu0 0
  %216 = vmatmul.mubr.bf16.gmra.mrb[0].mxu0 %v111
  %v217 = vpop.f32.mrb[0].mxu0
  %v218 = vadd.f32 %v133, %v217
  %v219 = vpop.f32.mrb[0].mxu0
  %v220 = vpop.f32.mrb[0].mxu0
  %v221 = vpop.f32.mrb[0].mxu0
  %222 = vdwg.mxu0
  %v223 = vmax.f32 %v218, 0.0
  %v224 = vld [vmem:[%s5] sm:$0xff]
  %v225 = vld [vmem:[%s5 + $0x8] sm:$0xff]
  %v226 = vld [vmem:[%s5 + $0x10] sm:$0xff]
  %v227 = vld [vmem:[%s5 + $0x18] sm:$0xff]
  %v228 = vld [vmem:[%s5 + $0x20] sm:$0xff]
  %v229 = vld [vmem:[%s5 + $0x28] sm:$0xff]
  %v230 = vld [vmem:[%s5 + $0x30] sm:$0xff]
  %v231 = vld [vmem:[%s5 + $0x38] sm:$0xff]
  %v232 = vld [vmem:[%s5 + $0x40] sm:$0xff]
  %v233 = vld [vmem:[%s5 + $0x48] sm:$0xff]
  %v234 = vld [vmem:[%s5 + $0x50] sm:$0xff]
  %v235 = vld [vmem:[%s5 + $0x58] sm:$0xff]
  %v236 = vld [vmem:[%s5 + $0x60] sm:$0xff]
  %v237 = vld [vmem:[%s5 + $0x68] sm:$0xff]
  %v238 = vld [vmem:[%s5 + $0x70] sm:$0xff]
  %v239 = vld [vmem:[%s5 + $0x78] sm:$0xff]
  %v240 = vld [vmem:[%s6] sm:$0x1]
  %v242 = vlaneseq
  %v243 = vshrl.u32 %v242, 7
  %v244 = vsub.s32 0, %v243
  %v245 = vrot.slane %v240, %v244
  %247 = vmatprep.subr.mxu0 0.0
  %248 = vmatpush1.msra.mxu0 %v224
  %249 = vmatprep.subr.mxu0 0.0
  %250 = vmatpush1.msra.mxu0 %v225
  %251 = vmatprep.subr.mxu0 0.0
  %252 = vmatpush1.msra.mxu0 %v226
  %253 = vmatprep.subr.mxu0 0.0
  %254 = vmatpush1.msra.mxu0 %v227
  %255 = vmatprep.subr.mxu0 0.0
  %256 = vmatpush1.msra.mxu0 %v228
  %257 = vmatprep.subr.mxu0 0.0
  %258 = vmatpush1.msra.mxu0 %v229
  %259 = vmatprep.subr.mxu0 0.0
  %260 = vmatpush1.msra.mxu0 %v230
  %261 = vmatprep.subr.mxu0 0.0
  %262 = vmatpush1.msra.mxu0 %v231
  %263 = vmatprep.subr.mxu0 0.0
  %264 = vmatpush1.msra.mxu0 %v232
  %265 = vmatprep.subr.mxu0 0.0
  %266 = vmatpush1.msra.mxu0 %v233
  %267 = vmatprep.subr.mxu0 0.0
  %268 = vmatpush1.msra.mxu0 %v234
  %269 = vmatprep.subr.mxu0 0.0
  %270 = vmatpush1.msra.mxu0 %v235
  %271 = vmatprep.subr.mxu0 0.0
  %272 = vmatpush1.msra.mxu0 %v236
  %273 = vmatprep.subr.mxu0 0.0
  %274 = vmatpush1.msra.mxu0 %v237
  %275 = vmatprep.subr.mxu0 0.0
  %276 = vmatpush1.msra.mxu0 %v238
  %277 = vmatprep.subr.mxu0 0.0
  %278 = vmatpush1.msra.mxu0 %v239
  %279 = vmatprep.subr.mxu0 0.0
  %280 = vmatpush1.msra.mxu0 0.0
  %281 = vmatprep.subr.mxu0 0.0
  %282 = vmatpush1.msra.mxu0 0.0
  %283 = vmatprep.subr.mxu0 0.0
  %284 = vmatpush1.msra.mxu0 0.0
  %285 = vmatprep.subr.mxu0 0.0
  %286 = vmatpush1.msra.mxu0 0.0
  %287 = vmatprep.subr.mxu0 0.0
  %288 = vmatpush1.msra.mxu0 0.0
  %289 = vmatprep.subr.mxu0 0.0
  %290 = vmatpush1.msra.mxu0 0.0
  %291 = vmatprep.subr.mxu0 0.0
  %292 = vmatpush1.msra.mxu0 0.0
  %293 = vmatprep.subr.mxu0 0.0
  %294 = vmatpush1.msra.mxu0 0.0
  %295 = vmatprep.subr.mxu0 0.0
  %296 = vmatpush1.msra.mxu0 0.0
  %297 = vmatprep.subr.mxu0 0.0
  %298 = vmatpush1.msra.mxu0 0.0
  %299 = vmatprep.subr.mxu0 0.0
  %300 = vmatpush1.msra.mxu0 0.0
  %301 = vmatprep.subr.mxu0 0.0
  %302 = vmatpush1.msra.mxu0 0.0
  %303 = vmatprep.subr.mxu0 0.0
  %304 = vmatpush1.msra.mxu0 0.0
  %305 = vmatprep.subr.mxu0 0.0
  %306 = vmatpush1.msra.mxu0 0.0
  %307 = vmatprep.subr.mxu0 0.0
  %308 = vmatpush1.msra.mxu0 0.0
  %309 = vmatprep.subr.mxu0 0.0
  %310 = vmatpush1.msra.mxu0 0.0
  %311 = vmatprep.mubr.f32.mxu0 0.0
  %312 = vmatmul.mubr.f32.gmra.mrb[0].mxu0 %v223
  %v313 = vpop.f32.mrb[0].mxu0
  %v314 = vadd.f32 %v245, %v313
  %v315 = vpop.f32.mrb[0].mxu0
  %316 = vdwg.mxu0
  %vm317 = vcmask 15360
  %318 = vst.msk [vmem:[%s7] sm:$0xff] %vm317, %v314
  // Predicated region
  $region30: #{tpu_custom_call.1} parent=0 // pred_check
    _
  $region31: #{tpu_custom_call.1} parent=0 // pred_check_branch
    %320 = sbr.rel (0) target = $region33
  $region32: #{tpu_custom_call.1} parent=0 // pred_region
    _
  $region33: #{tpu_custom_call.1} parent=0 // pred_fallthru
    _
  // Predicated region
  $region34: #{tpu_custom_call.1} parent=0 // pred_check
    _
  $region35: #{tpu_custom_call.1} parent=0 // pred_check_branch
    %322 = sbr.rel (0) target = $region37
  $region36: #{tpu_custom_call.1} parent=0 // pred_region
    _
  $region37: #{tpu_custom_call.1} parent=0 // pred_fallthru
    _

</llo_original>
